<compile_context>
chip_gen: v7x
topology: tpu7x:2x2x1
jax: 0.10.0
libtpu: 0.0.40
codegen_flags: <defaults>
</compile_context>

<pallas_src>
import math

import jax
import jax.numpy as jnp
from jax.experimental import pallas as pl
from jax.experimental.pallas import tpu as pltpu


def _spatial_dropout_kernel(mask_ref, x_ref, out_ref):
    # mask_ref: (b_tile, 1, D_eff) per-(batch, feature) scale (already x dtype).
    # x_ref / out_ref: (b_tile, t_tile, D_eff).
    # Implicit sublane broadcast of the mask over the T axis; native-dtype math.
    out_ref[...] = x_ref[...] * mask_ref[...]


def _block_target_bytes():
    """Generation-aware per-block byte target for this streaming kernel."""
    try:
        vmem = pltpu.get_tpu_info().vmem_capacity_bytes
    except Exception:  # conservative fallback if the query is unavailable
        vmem = None
    if vmem is not None and vmem <= (64 << 20):
        # v7x (64 MiB VMEM / TC, ~3.2 TB/s HBM): bigger blocks amortize the
        # ~0.35 us per-grid-step overhead better; 4x5 MiB buffers still fit.
        return 5 << 20
    # v5e / v6e: ~4 MiB is at/over the measured roofline knee.
    return 4 << 20


def _choose_tiles(B, T, D_eff, itemsize, target_bytes):
    """Pick (b_tile, t_tile) so each block is ~target_bytes and (8,128)-legal."""
    row_bytes = T * D_eff * itemsize
    if row_bytes <= target_bytes:
        # Batch-fold: whole (T, D_eff) row per block, several batch rows.
        t_tile = T
        b_tile = min(B, max(1, target_bytes // max(1, row_bytes)))
        while b_tile > 1 and B % b_tile != 0:  # prefer a divisor of B
            b_tile -= 1
        return b_tile, t_tile

    # One batch row per block, tile along T.
    b_tile = 1
    t_target = max(8, target_bytes // (D_eff * itemsize))
    if t_target >= T:
        return b_tile, T  # full extent -> always legal
    t_tile = max(8, (t_target // 8) * 8)  # keep second-to-last dim a multiple of 8
    # Prefer a divisor of T within ~75% of the target so every step is a full,
    # unmasked DMA (no ragged final block).
    cand, floor = t_tile, max(8, int(0.75 * t_tile))
    while cand >= floor:
        if T % cand == 0:
            t_tile = cand
            break
        cand -= 8
    return b_tile, min(t_tile, T)


def spatial_dropout(x, key, drop, training=True):
    """JAX/Pallas equivalent of SpatialDropout.forward(x) with default noise_shape.

    x: (B, ..., D) array.
    key: a jax PRNG key (preferred) or a python int seed.  Pass a fresh key
         each step -- reusing the same seed reapplies the identical mask.
    drop: dropout probability (python float -> one compile per distinct value).
    """
    drop = float(drop)
    if (not training) or drop == 0.0:
        return x
    if drop == 1.0:
        # PyTorch path: noises.fill_(0.0) -> all zeros.
        return jnp.zeros_like(x)
    if isinstance(key, int):
        key = jax.random.PRNGKey(key)

    orig_shape = x.shape
    B, D = orig_shape[0], orig_shape[-1]
    itemsize = jnp.dtype(x.dtype).itemsize

    # Fold all middle (spatial / sequence) dims into one broadcast axis.
    x3 = x.reshape(B, -1, D)
    T = x3.shape[1]

    # One Bernoulli(1-drop)/(1-drop) scale per (batch, feature); computed once,
    # in the input dtype (same as PyTorch's noise tensor).  For bf16/fp8 inputs
    # an f32 mask cast at the multiply would be marginally more accurate.
    keep = jax.random.bernoulli(key, p=1.0 - drop, shape=(B, 1, D))
    mask = jnp.where(keep,
                     jnp.asarray(1.0 / (1.0 - drop), x.dtype),
                     jnp.asarray(0.0, x.dtype))

    # Lane-widening: make the block's last dim a multiple of 128 when D isn't,
    # by folding k consecutive T rows into the lane axis (row-major reshape) and
    # tiling the mask k times along the lane axis (mask[j] == mask[j % D]).
    k = 1
    if D % 128 != 0:
        k_min = 128 // math.gcd(D, 128)
        if T % k_min == 0:
            k = k_min
        # else: TODO(synk): pad/repack to a lane-dense layout when T % k != 0;
        # falling back to lane width D is still correct, just uses masked stores.
    D_eff, T_eff = D * k, T // k
    x3 = x3.reshape(B, T_eff, D_eff)
    mask_eff = jnp.tile(mask, (1, 1, k)) if k > 1 else mask

    target_bytes = _block_target_bytes()
    b_tile, t_tile = _choose_tiles(B, T_eff, D_eff, itemsize, target_bytes)

    # v7x has 2 TensorCores and both grid axes are "parallel": make sure there
    # are >= 2 grid steps whenever there is enough work to split.
    if pl.cdiv(B, b_tile) * pl.cdiv(T_eff, t_tile) < 2:
        if B >= 2:
            b_tile = max(1, B // 2)
            while b_tile > 1 and B % b_tile != 0:
                b_tile -= 1
        elif t_tile >= 16:
            t_tile = max(8, ((t_tile // 2) // 8) * 8)

    grid = (pl.cdiv(B, b_tile), pl.cdiv(T_eff, t_tile))

    # Explicit VMEM budget: 2x double-buffered input + output blocks + mask
    # blocks, with headroom.  This keeps the larger blocks legal even under
    # v5e's 16 MiB scoped-VMEM default.
    block_bytes = b_tile * t_tile * D_eff * itemsize
    mask_block_bytes = b_tile * D_eff * itemsize
    vmem_limit = int((4 * block_bytes + 2 * mask_block_bytes) * 1.25) + (2 << 20)
    vmem_limit = max(vmem_limit, 16 << 20)

    out = pl.pallas_call(
        _spatial_dropout_kernel,
        out_shape=jax.ShapeDtypeStruct((B, T_eff, D_eff), x.dtype),
        grid=grid,
        in_specs=[
            # Mask block index is constant along the inner T axis -> Pallas
            # re-DMAs it only when the batch group changes (once per B step).
            pl.BlockSpec((b_tile, 1, D_eff), lambda b, t: (b, 0, 0)),
            pl.BlockSpec((b_tile, t_tile, D_eff), lambda b, t: (b, t, 0)),
        ],
        out_specs=pl.BlockSpec((b_tile, t_tile, D_eff), lambda b, t: (b, t, 0)),
        # Pure streaming op: alias x -> out.  Only saves an HBM allocation if
        # the caller donates x; otherwise XLA inserts a defensive copy.
        input_output_aliases={1: 0},
        compiler_params=pltpu.CompilerParams(
            dimension_semantics=("parallel", "parallel"),
            vmem_limit_bytes=vmem_limit),
    )(mask_eff, x3)
    return out.reshape(orig_shape)


if __name__ == "__main__":
    root = jax.random.PRNGKey(0)
    kx1, kx2 = jax.random.split(root, 2)
    drop = 0.3
    scale = 1.0 / (1.0 - drop)

    # --- Case 1: lane-dense D (multiple of 128), tiny rows -> batch folding. ---
    B, T, D = 2, 8, 128
    x = jax.random.normal(kx1, (B, T, D), dtype=jnp.float32)
    out = jax.block_until_ready(
        spatial_dropout(x, jax.random.PRNGKey(0), drop, training=True))
    assert out.shape == x.shape and out.dtype == x.dtype
    # Each (b, :, d) column is either all zeros (dropped) or x * 1/(1-drop) (kept).
    zero_col = jnp.all(out == 0.0, axis=1)
    scaled_col = jnp.all(jnp.abs(out - x * scale) < 1e-4, axis=1)
    assert bool(jnp.all(zero_col | scaled_col))
    assert bool(jnp.any(zero_col)) and bool(jnp.any(scaled_col))

    # --- Case 2: D < 128 -> lane-widening reshape path. ---
    B2, T2, D2 = 2, 16, 64
    x2 = jax.random.normal(kx2, (B2, T2, D2), dtype=jnp.float32)
    out2 = jax.block_until_ready(
        spatial_dropout(x2, jax.random.PRNGKey(1), drop, training=True))
    assert out2.shape == x2.shape and out2.dtype == x2.dtype
    zero_col2 = jnp.all(out2 == 0.0, axis=1)
    scaled_col2 = jnp.all(jnp.abs(out2 - x2 * scale) < 1e-4, axis=1)
    assert bool(jnp.all(zero_col2 | scaled_col2))

    # --- Eval / drop == 0 -> identity; drop == 1 -> zeros. ---
    out_eval = jax.block_until_ready(spatial_dropout(x, 0, drop, training=False))
    assert jnp.array_equal(out_eval, x)
    out_all = jax.block_until_ready(spatial_dropout(x, 0, 1.0, training=True))
    assert bool(jnp.all(out_all == 0.0))

    print("KERNEL_OK")
</pallas_src>

<mosaic_0001>
module attributes {stable_mosaic.version = 11 : i64} {
  func.func @_spatial_dropout_kernel(%arg0: i32, %arg1: i32, %arg2: memref<1x1x128xf32, #tpu.memory_space<vmem>>, %arg3: memref<1x8x128xf32, #tpu.memory_space<vmem>>, %arg4: memref<1x8x128xf32, #tpu.memory_space<vmem>>) attributes {dimension_semantics = [#tpu.dimension_semantics<parallel>, #tpu.dimension_semantics<parallel>], iteration_bounds = array<i64: 2, 1>, scalar_prefetch = 0 : i64, scratch_operands = 0 : i64, tpu.core_type = #tpu.core_type<tc>, window_params = [{transform_indices = @transform_0, window_bounds = array<i64: 1, 1, 128>}, {transform_indices = @transform_1, window_bounds = array<i64: 1, 8, 128>}, {transform_indices = @transform_2, window_bounds = array<i64: 1, 8, 128>}]} {
    %c0 = arith.constant 0 : index
    %c0_0 = arith.constant 0 : index
    %c0_1 = arith.constant 0 : index
    %0 = vector.load %arg3[%c0, %c0_0, %c0_1] : memref<1x8x128xf32, #tpu.memory_space<vmem>>, vector<1x8x128xf32>
    %c0_2 = arith.constant 0 : index
    %c0_3 = arith.constant 0 : index
    %c0_4 = arith.constant 0 : index
    %1 = vector.load %arg2[%c0_2, %c0_3, %c0_4] : memref<1x1x128xf32, #tpu.memory_space<vmem>>, vector<1x1x128xf32>
    %2 = vector.broadcast %1 : vector<1x1x128xf32> to vector<1x8x128xf32>
    %3 = arith.mulf %0, %2 : vector<1x8x128xf32>
    %c0_5 = arith.constant 0 : index
    %c0_6 = arith.constant 0 : index
    %c0_7 = arith.constant 0 : index
    %4 = vector.load %arg4[%c0_5, %c0_6, %c0_7] : memref<1x8x128xf32, #tpu.memory_space<vmem>>, vector<1x8x128xf32>
    tpu.vector_store %arg4[%c0_5, %c0_6, %c0_7], %3 {strides = array<i32>} : memref<1x8x128xf32, #tpu.memory_space<vmem>>, vector<1x8x128xf32>,
    return
  }
  func.func @transform_0(%arg0: i32, %arg1: i32) -> (i32, i32, i32) {
    %c0_i32 = arith.constant 0 : i32
    %c0_i32_0 = arith.constant 0 : i32
    %c0_i32_1 = arith.constant 0 : i32
    return %arg0, %c0_i32, %c0_i32_0 : i32, i32, i32
  }
  func.func @transform_1(%arg0: i32, %arg1: i32) -> (i32, i32, i32) {
    %c0_i32 = arith.constant 0 : i32
    %c0_i32_0 = arith.constant 0 : i32
    return %arg0, %arg1, %c0_i32 : i32, i32, i32
  }
  func.func @transform_2(%arg0: i32, %arg1: i32) -> (i32, i32, i32) {
    %c0_i32 = arith.constant 0 : i32
    %c0_i32_0 = arith.constant 0 : i32
    return %arg0, %arg1, %c0_i32 : i32, i32, i32
  }
}

</mosaic_0001>

<llo_original>
// kernel: tpu_custom_call.1
$region0: #{tpu_custom_call.1}
  #allocation0 [shape = 'u32[]', space=smem, size = 0x4, offset = 0x4, fixed_abs, tag = 'smem constant byte address 0x4 - core index']
  #allocation1 [shape = 'u32[144,128]{1,0:T(1,128)}', space=vmem, size = 0x12000, scoped, tag = 'internal scratch']
  %s0 = inlined_call_operand.vmem [shape: f32[2,1,128], index: 0, kind: input, shape index: {}]
  %s1 = inlined_call_operand.hbm [shape: f32[2,8,128], index: 1, kind: input, shape index: {}, may-alias: {1,2}]
  %s2 = inlined_call_operand.hbm [shape: f32[2,8,128], index: 2, kind: output, shape index: {}, may-alias: {1,2}]
  %s3 = sld [smem:[#allocation0]]
  $region45: #{tpu_custom_call.1} parent=0
    _
  %s5 = ssub.s32 1, %s3
  %s6 = scalar_select 0, %s5, %s3
  $region1: #{tpu_custom_call.1} parent=0
    #allocation2 [shape = 'u8[8192]{0}', space=vmem, size = 0x2000, scoped, tag = 'input window, operand 1']
    #allocation3 [shape = 's32[2]{0}', space=sflag, size = 0x8, scoped, tag = 'scoped memory for tpu_custom_call.1']
    #allocation4 [shape = 's32[2]{0}', space=sflag, size = 0x8, scoped, tag = 'scoped memory for tpu_custom_call.1']
    #allocation5 [shape = 'u8[8192]{0}', space=vmem, size = 0x2000, scoped, tag = 'output window, operand 0']
    %7 = vsyncpa [#allocation3], 0
    %s8 = scalar_lea.sflag [#allocation3], 1
    %9 = vsyncpa %s8, 0
    %10 = vsyncpa [#allocation4], 0
    %s11 = scalar_lea.sflag [#allocation4], 1
    %12 = vsyncpa %s11, 0
    loop: start=0, step=1, limit=4
    $region2: #{tpu_custom_call.1} parent=1 // loop_pre_header
      _
    $region3: #{tpu_custom_call.1} parent=1 // loop_header
      %s14 = sphi 0, %s18
      %p15 = scmp.ge.s32.totalorder %s14, 4
      %s21 = sphi 0, %s33
      %s22 = sphi 0, %s29
      %s23 = sphi 0, %s21
      %s24 = sphi 0, %s22
      %s25 = sphi 0, %s23
      %s26 = sphi 0, %s24
      %s36 = sphi 0, %s38
      %s39 = sphi 0, %s36
      %s40 = sphi 0, %s39
      %s56 = sphi 0, %s40
      %s64 = sphi 0, %s66
      %s67 = sphi 0, %s64
      %s68 = sphi 0, %s67
      %s84 = sphi 0, %s68
      %s92 = sphi 0, %s94
      %s95 = sphi 0, %s92
      %s96 = sphi 0, %s95
      %s112 = sphi 0, %s96
    $region4: #{tpu_custom_call.1} parent=1 // loop_header_branch
      %17 = sbr.rel (%p15) target = $region8
    $region5: #{tpu_custom_call.1} parent=1 // loop_body
      %s19 = ssub.s32 %s14, 1
      %s20 = ssub.s32 %s14, 2
      %s27 = sadd.s32 1, %s22
      %p28 = scmp.ge.s32.totalorder %s27, 1
      %s29 = scalar_select %p28, 0, %s27
      %s30 = sadd.s32 1, %s21
      %s31 = scalar_select %p28, %s30, %s21
      %p32 = scmp.ge.s32.totalorder %s31, 2
      %s33 = scalar_select %p32, 0, %s31
      %s34 = ssub.s32 %s21, %s33
      %p35 = scmp.eq.s32.totalorder %s34, 0
      %s37 = sadd.s32 %s36, 1
      %s38 = scalar_select %p35, %s36, %s37
      %p41 = pneg %p35
      %p42 = scmp.eq.s32.totalorder %s14, 1
      %p43 = por %p41, %p42
      %p44 = scmp.ne.s32.totalorder %s36, %s39
      %p45 = scmp.eq.s32.totalorder %s14, 0
      %p46 = por %p44, %p45
      %p47 = scmp.ne.s32.totalorder %s36, %s39
      %p48 = scmp.eq.s32.totalorder %s19, 1
      %p49 = por %p47, %p48
      %p50 = scmp.ne.s32.totalorder %s39, %s40
      %p51 = scmp.eq.s32.totalorder %s19, 0
      %p52 = por %p50, %p51
      %p53 = scmp.ne.s32.totalorder %s39, %s40
      %p54 = scmp.eq.s32.totalorder %s20, 1
      %p55 = por %p53, %p54
      %p57 = scmp.ne.s32.totalorder %s40, %s56
      %p58 = scmp.eq.s32.totalorder %s20, 0
      %p59 = por %p57, %p58
      %s60 = ssub.s32 %s21, %s33
      %s61 = ssub.s32 %s22, %s29
      %s62 = sor.u32 %s60, %s61
      %p63 = scmp.eq.s32.totalorder %s62, 0
      %s65 = sadd.s32 %s64, 1
      %s66 = scalar_select %p63, %s64, %s65
      %p69 = pneg %p63
      %p70 = scmp.eq.s32.totalorder %s14, 1
      %p71 = por %p69, %p70
      %p72 = scmp.ne.s32.totalorder %s64, %s67
      %p73 = scmp.eq.s32.totalorder %s14, 0
      %p74 = por %p72, %p73
      %p75 = scmp.ne.s32.totalorder %s64, %s67
      %p76 = scmp.eq.s32.totalorder %s19, 1
      %p77 = por %p75, %p76
      %p78 = scmp.ne.s32.totalorder %s67, %s68
      %p79 = scmp.eq.s32.totalorder %s19, 0
      %p80 = por %p78, %p79
      %p81 = scmp.ne.s32.totalorder %s67, %s68
      %p82 = scmp.eq.s32.totalorder %s20, 1
      %p83 = por %p81, %p82
      %p85 = scmp.ne.s32.totalorder %s68, %s84
      %p86 = scmp.eq.s32.totalorder %s20, 0
      %p87 = por %p85, %p86
      %s88 = ssub.s32 %s21, %s33
      %s89 = ssub.s32 %s22, %s29
      %s90 = sor.u32 %s88, %s89
      %p91 = scmp.eq.s32.totalorder %s90, 0
      %s93 = sadd.s32 %s92, 1
      %s94 = scalar_select %p91, %s92, %s93
      %p97 = pneg %p91
      %p98 = scmp.eq.s32.totalorder %s14, 1
      %p99 = por %p97, %p98
      %p100 = scmp.ne.s32.totalorder %s92, %s95
      %p101 = scmp.eq.s32.totalorder %s14, 0
      %p102 = por %p100, %p101
      %p103 = scmp.ne.s32.totalorder %s92, %s95
      %p104 = scmp.eq.s32.totalorder %s19, 1
      %p105 = por %p103, %p104
      %p106 = scmp.ne.s32.totalorder %s95, %s96
      %p107 = scmp.eq.s32.totalorder %s19, 0
      %p108 = por %p106, %p107
      %p109 = scmp.ne.s32.totalorder %s95, %s96
      %p110 = scmp.eq.s32.totalorder %s20, 1
      %p111 = por %p109, %p110
      %p113 = scmp.ne.s32.totalorder %s96, %s112
      %p114 = scmp.eq.s32.totalorder %s20, 0
      %p115 = por %p113, %p114
      %p116 = scmp.le.s32.totalorder 1, %s14
      %p117 = scmp.lt.s32.totalorder %s14, 3
      %p118 = pnand %p116, %p117
      %p119 = pneg %p118
      // Predicated region
      $region9: #{tpu_custom_call.1} parent=5 // pred_check
        _
      $region10: #{tpu_custom_call.1} parent=5 // pred_check_branch
        %121 = sbr.rel (%p118) target = $region12
      $region11: #{tpu_custom_call.1} parent=5 // pred_region
        %s122 = ssub.s32 %s14, 1
      $region12: #{tpu_custom_call.1} parent=5 // pred_fallthru
        _
      %p123 = scmp.lt.s32.totalorder %s14, 2
      // Predicated region
      $region13: #{tpu_custom_call.1} parent=5 // pred_check
        %p124 = pneg %p123
      $region14: #{tpu_custom_call.1} parent=5 // pred_check_branch
        %126 = sbr.rel (%p124) target = $region16
      $region15: #{tpu_custom_call.1} parent=5 // pred_region
        // Predicated region
        $region17: #{tpu_custom_call.1} parent=15 // pred_check
          %p127 = pneg %p46
        $region18: #{tpu_custom_call.1} parent=15 // pred_check_branch
          %129 = sbr.rel (%p127) target = $region20
        $region19: #{tpu_custom_call.1} parent=15 // pred_region
          %p130 = scmp.lt.s32.totalorder %s21, 1
          %s131 = scalar_select %p130, %s21, 1
          %s132 = scalar_lea.vmem %s0, %s131
        $region20: #{tpu_custom_call.1} parent=15 // pred_fallthru
          _
        // Predicated region
        $region21: #{tpu_custom_call.1} parent=15 // pred_check
          %p133 = pneg %p74
        $region22: #{tpu_custom_call.1} parent=15 // pred_check_branch
          %135 = sbr.rel (%p133) target = $region24
        $region23: #{tpu_custom_call.1} parent=15 // pred_region
          %s136 = sand.u32 %s64, 1
          %s137 = scalar_lea.sflag [#allocation3], %s136
          %s138 = sand.u32 %s64, 1
          %s139 = smul.addr %s138, 8
          %s140 = scalar_lea.vmem [#allocation2], %s139
          %s142 = ssub.s32 128, 128
          %143 = vsyncadd %s137, %s142
          %s144 = sadd.s32 %s22, %s21
          %s145 = smul.addr %s144, 128
          %s146 = scalar_lea.hbm %s1, %s145
          %s148 = sshll.u32 %s140, 4
          %s149 = int_to_ptr.vmem [resolvable:$true] %s148
          %151 = dma.hbm_to_vmem [thread:$0]  %s146, 128, %s149, %s137
        $region24: #{tpu_custom_call.1} parent=15 // pred_fallthru
          _
      $region16: #{tpu_custom_call.1} parent=5 // pred_fallthru
        _
      %p152 = scmp.le.s32.totalorder 1, %s14
      %p153 = scmp.lt.s32.totalorder %s14, 3
      %p154 = pnand %p152, %p153
      %p155 = pneg %p154
      // Predicated region
      $region25: #{tpu_custom_call.1} parent=5 // pred_check
        _
      $region26: #{tpu_custom_call.1} parent=5 // pred_check_branch
        %157 = sbr.rel (%p154) target = $region28
      $region27: #{tpu_custom_call.1} parent=5 // pred_region
        %s158 = ssub.s32 %s14, 1
        %s159 = sand.u32 %s67, 1
        %s160 = scalar_lea.sflag [#allocation3], %s159
        %s161 = sand.u32 %s67, 1
        %s162 = smul.addr %s161, 8
        %s163 = scalar_lea.vmem [#allocation2], %s162
        // Predicated region
        $region29: #{tpu_custom_call.1} parent=27 // pred_check
          %p164 = pneg %p80
        $region30: #{tpu_custom_call.1} parent=27 // pred_check_branch
          %166 = sbr.rel (%p164) target = $region32
        $region31: #{tpu_custom_call.1} parent=27 // pred_region
          %167 = dma.done %s160, 128
        $region32: #{tpu_custom_call.1} parent=27 // pred_fallthru
          _
        %p168 = scmp.lt.s32.totalorder %s23, 1
        %s169 = scalar_select %p168, %s23, 1
        %s170 = scalar_lea.vmem %s0, %s169
        %p171 = pneg %p52
        %p172 = pneg %p49
        %s173 = sand.u32 %s67, 1
        %s174 = scalar_lea.sflag [#allocation3], %s173
        %s175 = sand.u32 %s67, 1
        %s176 = smul.addr %s175, 8
        %s177 = scalar_lea.vmem [#allocation2], %s176
        %p178 = pneg %p80
        %p179 = pneg %p77
        %p180 = pneg %p108
        %p181 = pneg %p105
        %s182 = sand.u32 %s95, 1
        %s183 = scalar_lea.sflag [#allocation4], %s182
        %s184 = sand.u32 %s95, 1
        %s185 = smul.addr %s184, 8
        %s186 = scalar_lea.vmem [#allocation5], %s185
        %p187 = scmp.lt.s32.totalorder %s23, 1
        %s188 = scalar_select %p187, %s23, 1
        %s189 = scalar_lea.vmem %s0, %s188
        %v190 = vld [vmem:[%s163] sm:$0xff]
        %v191 = vld [vmem:[%s189] sm:$0x1]
        %v193 = vlaneseq
        %v194 = vshrl.u32 %v193, 7
        %v195 = vsub.s32 0, %v194
        %v196 = vrot.slane %v191, %v195
        %v198 = vmul.f32 %v190, %v196
        %199 = vst [vmem:[%s186] sm:$0xff] %v198
        %s200 = sand.u32 %s95, 1
        %s201 = scalar_lea.sflag [#allocation4], %s200
        %s202 = sand.u32 %s95, 1
        %s203 = smul.addr %s202, 8
        %s204 = scalar_lea.vmem [#allocation5], %s203
        // Predicated region
        $region33: #{tpu_custom_call.1} parent=27 // pred_check
          %p205 = pneg %p105
        $region34: #{tpu_custom_call.1} parent=27 // pred_check_branch
          %207 = sbr.rel (%p205) target = $region36
        $region35: #{tpu_custom_call.1} parent=27 // pred_region
          %s209 = ssub.s32 128, 128
          %210 = vsyncadd %s201, %s209
          %s211 = sadd.s32 %s24, %s23
          %s212 = smul.addr %s211, 128
          %s213 = scalar_lea.hbm %s2, %s212
          %s215 = sshll.u32 %s204, 4
          %s216 = int_to_ptr.vmem [resolvable:$true] %s215
          %218 = dma.vmem_to_hbm [thread:$0]  %s216, 128, %s213, %s201
        $region36: #{tpu_custom_call.1} parent=27 // pred_fallthru
          _
      $region28: #{tpu_custom_call.1} parent=5 // pred_fallthru
        _
      %p219 = scmp.le.s32.totalorder 2, %s14
      // Predicated region
      $region37: #{tpu_custom_call.1} parent=5 // pred_check
        %p220 = pneg %p219
      $region38: #{tpu_custom_call.1} parent=5 // pred_check_branch
        %222 = sbr.rel (%p220) target = $region40
      $region39: #{tpu_custom_call.1} parent=5 // pred_region
        %s223 = ssub.s32 %s14, 2
        // Predicated region
        $region41: #{tpu_custom_call.1} parent=39 // pred_check
          %p224 = pneg %p111
        $region42: #{tpu_custom_call.1} parent=39 // pred_check_branch
          %226 = sbr.rel (%p224) target = $region44
        $region43: #{tpu_custom_call.1} parent=39 // pred_region
          %s227 = sand.u32 %s96, 1
          %s228 = scalar_lea.sflag [#allocation4], %s227
          %s229 = sand.u32 %s96, 1
          %s230 = smul.addr %s229, 8
          %s231 = scalar_lea.vmem [#allocation5], %s230
          %232 = dma.done %s228, 128
        $region44: #{tpu_custom_call.1} parent=39 // pred_fallthru
          _
      $region40: #{tpu_custom_call.1} parent=5 // pred_fallthru
        _
    $region6: #{tpu_custom_call.1} parent=1 // loop_footer
      %s18 = sadd.s32 1, %s14
    $region7: #{tpu_custom_call.1} parent=1 // loop_footer_branch
      %13 = sbr.rel target = $region3
    $region8: #{tpu_custom_call.1} parent=1 // loop_exit
      _
    %233 = vsyncpa [#allocation3], 1
    %s234 = scalar_lea.sflag [#allocation3], 1
    %235 = vsyncpa %s234, 1
    %236 = vsyncpa [#allocation4], 1
    %s237 = scalar_lea.sflag [#allocation4], 1
    %238 = vsyncpa %s237, 1

</llo_original>
